<compile_context>
chip_gen: v7x
topology: tpu7x:2x2x1
jax: 0.10.0
libtpu: 0.0.40
codegen_flags: <defaults>
</compile_context>

<pallas_src>
import functools

import jax
import jax.numpy as jnp
from jax.experimental import pallas as pl
from jax.experimental.pallas import tpu as pltpu

EPS = 1e-5
_MiB = 1024 * 1024


# --------------------------------------------------------------------------
# Budget / tiling helpers
# --------------------------------------------------------------------------
def _vmem_limit_bytes():
    """Generation-aware scoped-VMEM limit."""
    try:
        phys = int(pltpu.get_tpu_info().vmem_capacity_bytes)
    except Exception:
        phys = 64 * _MiB                      # conservative (v7x-sized) default
    if phys >= 100 * _MiB:                    # v5e / v6e: 128 MiB physical VMEM
        return 80 * _MiB
    return 40 * _MiB                          # v7x: 64 MiB per TensorCore


def _sublane_multiple(itemsize):
    # f32 -> 8, bf16 -> 16, int8/fp8 -> 32 (sublane packing).
    return max(8, 32 // itemsize)


def _pick_channel_tile(C, mult, cap=32):
    best = None
    t = mult
    while t <= min(cap, C):
        if C % t == 0:
            best = t
        t += mult
    return best if best is not None else C    # full-extent dim is always legal


def _pick_hw_tile(HW, cap_bytes, tc, itemsize):
    """Lane-dense HW tile under a per-block byte cap.  Returns (thw, ragged)."""
    cap_elems = max(128, (cap_bytes // max(1, tc * itemsize)) // 128 * 128)
    best = None
    t = 128
    limit = min(cap_elems, HW)
    while t <= limit:
        if HW % t == 0:
            best = t
        t += 128
    if best is not None:
        return best, False
    if HW <= cap_elems:                       # whole row fits: full-extent block
        return HW, False
    return cap_elems, True                    # ceil-div grid + masked last tile


def _pick_fused_channel_tile(C, N, HW, itemsize, mult, vmem_limit):
    """Largest channel tile whose (N, tc, HW) slab fits the fused VMEM budget
    (in+out double-buffered + f32 working set); prefers >=2 tiles so v7x can
    split the grid across both TensorCores.  None -> use two-pass fallback."""
    cands = [t for t in range(mult, C + 1, mult) if C % t == 0]
    if not cands:
        cands = [C]

    def fits(t):
        slab = N * t * HW
        need = 4 * slab * itemsize + 4 * slab * 4 + 2 * _MiB
        return need <= vmem_limit

    feasible = [t for t in cands if fits(t)]
    if not feasible:
        return None
    multi = [t for t in feasible if C // t >= 2]
    return max(multi) if multi else max(feasible)


# --------------------------------------------------------------------------
# Kernels
# --------------------------------------------------------------------------
def _fused_kernel(x_ref, gb_ref, o_ref):
    # x_ref: (N, tc, HW) slab of one channel tile.  gb_ref: (tc, 2) = [gamma, beta].
    # Single pass over x: stats (centered variance) + folded BN + max, 1R + 1W.
    x = x_ref[...].astype(jnp.float32)
    n, _, hw = x_ref.shape
    inv_count = 1.0 / float(n * hw)
    mean = jnp.sum(jnp.sum(x, axis=2, keepdims=True), axis=0, keepdims=True) * inv_count
    d = x - mean
    var = jnp.sum(jnp.sum(d * d, axis=2, keepdims=True), axis=0, keepdims=True) * inv_count
    gamma = gb_ref[:, 0:1][None]              # (1, tc, 1)
    beta = gb_ref[:, 1:2][None]
    scale = gamma * jax.lax.rsqrt(var + EPS)
    shift = beta - mean * scale
    o_ref[...] = jnp.maximum(x, x * scale + shift).astype(o_ref.dtype)


def _stats_kernel(x_ref, stat_ref, *, hw_total, ragged):
    # x_ref: (tc, thw) tile of one batch element.
    # stat_ref: (tc, 2) [sum, sum_sq] accumulator, resident across the HW axis
    # for this (batch, channel-tile) pair.
    @pl.when(pl.program_id(2) == 0)
    def _():
        stat_ref[...] = jnp.zeros_like(stat_ref)

    x = x_ref[...].astype(jnp.float32)
    if ragged:                                # mask the ragged last HW tile
        start = pl.program_id(2) * x.shape[1]
        lane = jax.lax.broadcasted_iota(jnp.int32, x.shape, 1)
        x = jnp.where(start + lane < hw_total, x, 0.0)
    stat_ref[:, 0:1] += jnp.sum(x, axis=1, keepdims=True)
    stat_ref[:, 1:2] += jnp.sum(x * x, axis=1, keepdims=True)


def _apply_kernel(x_ref, ss_ref, o_ref):
    # BN folded into per-channel scale/shift: out = max(x, x*scale + shift).
    x = x_ref[...].astype(jnp.float32)
    scale = ss_ref[:, 0:1]
    shift = ss_ref[:, 1:2]
    o_ref[...] = jnp.maximum(x, x * scale + shift).astype(o_ref.dtype)


# --------------------------------------------------------------------------
# Forward wrapper
# --------------------------------------------------------------------------
def frelu_forward(x_nchw, gamma, beta, *, force_two_pass=False):
    """FReLU forward == max(x, batchnorm_train(x)).  x: (N, C, H, W) f32/bf16."""
    N, C, H, W = x_nchw.shape
    HW = H * W
    x3 = x_nchw.reshape(N, C, HW)             # free reshape, no transpose
    dtype = x_nchw.dtype
    itemsize = jnp.dtype(dtype).itemsize
    mult = _sublane_multiple(itemsize)
    vmem_limit = _vmem_limit_bytes()
    gamma32 = gamma.astype(jnp.float32)
    beta32 = beta.astype(jnp.float32)

    # ---------- Fused single-pass path: 1 read + 1 write of x. ----------
    if not force_two_pass:
        tcf = _pick_fused_channel_tile(C, N, HW, itemsize, mult, vmem_limit)
        if tcf is not None:
            gb = jnp.stack([gamma32, beta32], axis=1)            # (C, 2)
            slab_spec = pl.BlockSpec((N, tcf, HW), lambda c: (0, c, 0))
            out3 = pl.pallas_call(
                _fused_kernel,
                out_shape=jax.ShapeDtypeStruct((N, C, HW), dtype),
                grid=(C // tcf,),
                in_specs=[slab_spec, pl.BlockSpec((tcf, 2), lambda c: (c, 0))],
                out_specs=slab_spec,
                compiler_params=pltpu.CompilerParams(
                    dimension_semantics=("parallel",),
                    vmem_limit_bytes=vmem_limit),
            )(x3, gb)
            return out3.reshape(N, C, H, W)

    # ---------- Two-pass fallback: 2 reads + 1 write of x. ----------
    tc = _pick_channel_tile(C, mult)

    # Pass 1: per-(batch, channel-tile) partial [sum, sum_sq]; batch & channel
    # axes are both "parallel" (>=2 megacore units on v7x whenever N>=2 or
    # C//tc>=2), HW is the resident-accumulator reduction axis.
    thw_s, ragged_s = _pick_hw_tile(HW, vmem_limit // 4, tc, itemsize)
    grid_s = (C // tc, N, -(-HW // thw_s))
    stats = pl.pallas_call(
        functools.partial(_stats_kernel, hw_total=HW, ragged=ragged_s),
        out_shape=jax.ShapeDtypeStruct((N, C, 2), jnp.float32),
        grid=grid_s,
        in_specs=[pl.BlockSpec((pl.Squeezed(), tc, thw_s),
                               lambda c, n, l: (n, c, l))],
        out_specs=pl.BlockSpec((pl.Squeezed(), tc, 2),
                               lambda c, n, l: (n, c, 0)),
        compiler_params=pltpu.CompilerParams(
            dimension_semantics=("parallel", "parallel", "arbitrary"),
            vmem_limit_bytes=vmem_limit),
    )(x3)

    # Tiny per-channel epilogue in plain JAX: fold BN into scale/shift.
    tot = jnp.sum(stats, axis=0)              # (C, 2)
    count = jnp.float32(N * HW)
    mean = tot[:, 0] / count
    var = jnp.maximum(tot[:, 1] / count - mean * mean, 0.0)   # biased (train) var
    scale = gamma32 * jax.lax.rsqrt(var + EPS)
    shift = beta32 - mean * scale
    ss = jnp.stack([scale, shift], axis=1)    # (C, 2)

    # Pass 2: out = max(x, x*scale + shift), lane-dense tiles, fully parallel.
    thw_a, _ = _pick_hw_tile(HW, vmem_limit // 8, tc, itemsize)
    grid_a = (C // tc, N, -(-HW // thw_a))
    x_spec = pl.BlockSpec((pl.Squeezed(), tc, thw_a), lambda c, n, l: (n, c, l))
    out3 = pl.pallas_call(
        _apply_kernel,
        out_shape=jax.ShapeDtypeStruct((N, C, HW), dtype),
        grid=grid_a,
        in_specs=[x_spec, pl.BlockSpec((tc, 2), lambda c, n, l: (c, 0))],
        out_specs=x_spec,
        compiler_params=pltpu.CompilerParams(
            dimension_semantics=("parallel", "parallel", "parallel"),
            vmem_limit_bytes=vmem_limit),
    )(x3, ss)
    return out3.reshape(N, C, H, W)


# --------------------------------------------------------------------------
# Reference + test
# --------------------------------------------------------------------------
def _reference(x_nchw, gamma, beta):
    # Pure-JAX reference of max(x, batchnorm_train(x)).
    mean = jnp.mean(x_nchw, axis=(0, 2, 3), keepdims=True)
    var = jnp.mean((x_nchw - mean) ** 2, axis=(0, 2, 3), keepdims=True)
    bn = (gamma.reshape(1, -1, 1, 1) * (x_nchw - mean)
          / jnp.sqrt(var + EPS) + beta.reshape(1, -1, 1, 1))
    return jnp.maximum(x_nchw, bn)


if __name__ == "__main__":
    key = jax.random.PRNGKey(0)
    N, C, H, W = 2, 4, 16, 16
    k = 3

    kx, kw = jax.random.split(key, 2)
    x = jax.random.normal(kx, (N, C, H, W), dtype=jnp.float32)

    # Depthwise-conv params exist in the module, but its output is dead in the
    # reference forward (overwritten by bn(x)); created for parity, not used.
    conv_weight = 0.01 * jax.random.normal(kw, (C, 1, k, k), dtype=jnp.float32)
    del conv_weight

    # BatchNorm2d default init: gamma=1, beta=0.
    gamma = jnp.ones((C,), dtype=jnp.float32)
    beta = jnp.zeros((C,), dtype=jnp.float32)

    ref = _reference(x, gamma, beta)

    # Fused single-pass path (auto-selected at this small shape).
    out_fused = jax.block_until_ready(frelu_forward(x, gamma, beta))
    assert out_fused.shape == (N, C, H, W)
    assert jnp.allclose(out_fused, ref, atol=1e-5, rtol=1e-5)

    # Two-pass fallback path.
    out_2p = jax.block_until_ready(frelu_forward(x, gamma, beta,
                                                 force_two_pass=True))
    assert jnp.allclose(out_2p, ref, atol=1e-5, rtol=1e-5)

    # bf16 I/O path (f32 math inside the kernels).
    xb = x.astype(jnp.bfloat16)
    ref_b = _reference(xb.astype(jnp.float32), gamma, beta)
    out_b = jax.block_until_ready(frelu_forward(xb, gamma, beta))
    assert out_b.dtype == jnp.bfloat16
    assert jnp.allclose(out_b.astype(jnp.float32), ref_b, atol=5e-2, rtol=5e-2)

    print("KERNEL_OK")
</pallas_src>

<mosaic_0001>
module attributes {stable_mosaic.version = 11 : i64} {
  func.func @_fused_kernel(%arg0: i32, %arg1: memref<2x4x256xf32, #tpu.memory_space<vmem>>, %arg2: memref<4x2xf32, #tpu.memory_space<vmem>>, %arg3: memref<2x4x256xf32, #tpu.memory_space<vmem>>) attributes {dimension_semantics = [#tpu.dimension_semantics<parallel>], iteration_bounds = array<i64: 1>, scalar_prefetch = 0 : i64, scratch_operands = 0 : i64, tpu.core_type = #tpu.core_type<tc>, window_params = [{transform_indices = @transform_0, window_bounds = array<i64: 2, 4, 256>}, {transform_indices = @transform_1, window_bounds = array<i64: 4, 2>}, {transform_indices = @transform_2, window_bounds = array<i64: 2, 4, 256>}]} {
    %c0 = arith.constant 0 : index
    %c0_0 = arith.constant 0 : index
    %c0_1 = arith.constant 0 : index
    %0 = vector.load %arg1[%c0, %c0_0, %c0_1] : memref<2x4x256xf32, #tpu.memory_space<vmem>>, vector<2x4x256xf32>
    %cst = arith.constant dense<0.000000e+00> : vector<2x4xf32>
    %1 = vector.multi_reduction <add>, %0, %cst [2] : vector<2x4x256xf32> to vector<2x4xf32>
    %2 = vector.shape_cast %1 : vector<2x4xf32> to vector<2x4x1xf32>
    %cst_2 = arith.constant dense<0.000000e+00> : vector<4x1xf32>
    %3 = vector.multi_reduction <add>, %2, %cst_2 [0] : vector<2x4x1xf32> to vector<4x1xf32>
    %4 = vector.shape_cast %3 : vector<4x1xf32> to vector<1x4x1xf32>
    %cst_3 = arith.constant 0.001953125 : f32
    %5 = vector.broadcast %cst_3 : f32 to vector<1x4x1xf32>
    %6 = arith.mulf %4, %5 : vector<1x4x1xf32>
    %7 = vector.broadcast %6 : vector<1x4x1xf32> to vector<2x4x256xf32>
    %8 = arith.subf %0, %7 : vector<2x4x256xf32>
    %9 = arith.mulf %8, %8 : vector<2x4x256xf32>
    %cst_4 = arith.constant dense<0.000000e+00> : vector<2x4xf32>
    %10 = vector.multi_reduction <add>, %9, %cst_4 [2] : vector<2x4x256xf32> to vector<2x4xf32>
    %11 = vector.shape_cast %10 : vector<2x4xf32> to vector<2x4x1xf32>
    %cst_5 = arith.constant dense<0.000000e+00> : vector<4x1xf32>
    %12 = vector.multi_reduction <add>, %11, %cst_5 [0] : vector<2x4x1xf32> to vector<4x1xf32>
    %13 = vector.shape_cast %12 : vector<4x1xf32> to vector<1x4x1xf32>
    %cst_6 = arith.constant 0.001953125 : f32
    %14 = vector.broadcast %cst_6 : f32 to vector<1x4x1xf32>
    %15 = arith.mulf %13, %14 : vector<1x4x1xf32>
    %c0_7 = arith.constant 0 : index
    %c0_8 = arith.constant 0 : index
    %16 = vector.load %arg2[%c0_7, %c0_8] : memref<4x2xf32, #tpu.memory_space<vmem>>, vector<4x1xf32>
    %17 = vector.shape_cast %16 : vector<4x1xf32> to vector<1x4x1xf32>
    %c0_9 = arith.constant 0 : index
    %c1 = arith.constant 1 : index
    %18 = vector.load %arg2[%c0_9, %c1] : memref<4x2xf32, #tpu.memory_space<vmem>>, vector<4x1xf32>
    %19 = vector.shape_cast %18 : vector<4x1xf32> to vector<1x4x1xf32>
    %cst_10 = arith.constant 9.99999974E-6 : f32
    %20 = vector.broadcast %cst_10 : f32 to vector<1x4x1xf32>
    %21 = arith.addf %15, %20 : vector<1x4x1xf32>
    %22 = math.rsqrt %21 : vector<1x4x1xf32>
    %23 = arith.mulf %17, %22 : vector<1x4x1xf32>
    %24 = arith.mulf %6, %23 : vector<1x4x1xf32>
    %25 = arith.subf %19, %24 : vector<1x4x1xf32>
    %26 = vector.broadcast %23 : vector<1x4x1xf32> to vector<2x4x256xf32>
    %27 = arith.mulf %0, %26 : vector<2x4x256xf32>
    %28 = vector.broadcast %25 : vector<1x4x1xf32> to vector<2x4x256xf32>
    %29 = arith.addf %27, %28 : vector<2x4x256xf32>
    %30 = arith.maximumf %0, %29 : vector<2x4x256xf32>
    %c0_11 = arith.constant 0 : index
    %c0_12 = arith.constant 0 : index
    %c0_13 = arith.constant 0 : index
    %31 = vector.load %arg3[%c0_11, %c0_12, %c0_13] : memref<2x4x256xf32, #tpu.memory_space<vmem>>, vector<2x4x256xf32>
    tpu.vector_store %arg3[%c0_11, %c0_12, %c0_13], %30 {strides = array<i32>} : memref<2x4x256xf32, #tpu.memory_space<vmem>>, vector<2x4x256xf32>,
    return
  }
  func.func @transform_0(%arg0: i32) -> (i32, i32, i32) {
    %c0_i32 = arith.constant 0 : i32
    %c0_i32_0 = arith.constant 0 : i32
    %c0_i32_1 = arith.constant 0 : i32
    return %c0_i32, %arg0, %c0_i32_0 : i32, i32, i32
  }
  func.func @transform_1(%arg0: i32) -> (i32, i32) {
    %c0_i32 = arith.constant 0 : i32
    %c0_i32_0 = arith.constant 0 : i32
    return %arg0, %c0_i32 : i32, i32
  }
  func.func @transform_2(%arg0: i32) -> (i32, i32, i32) {
    %c0_i32 = arith.constant 0 : i32
    %c0_i32_0 = arith.constant 0 : i32
    %c0_i32_1 = arith.constant 0 : i32
    return %c0_i32, %arg0, %c0_i32_0 : i32, i32, i32
  }
}

</mosaic_0001>

<llo_original>
// kernel: tpu_custom_call.1
$region0: #{tpu_custom_call.1}
  #allocation0 [shape = 'u32[]', space=smem, size = 0x4, offset = 0x4, fixed_abs, tag = 'smem constant byte address 0x4 - core index']
  #allocation1 [shape = 'u32[144,128]{1,0:T(1,128)}', space=vmem, size = 0x12000, scoped, tag = 'internal scratch']
  %s0 = inlined_call_operand.hbm [shape: f32[2,4,256], index: 0, kind: input, shape index: {}]
  %s1 = inlined_call_operand.vmem [shape: f32[4,2], index: 1, kind: input, shape index: {}]
  %s2 = inlined_call_operand.hbm [shape: f32[2,4,256], index: 2, kind: output, shape index: {}]
  %s3 = sld [smem:[#allocation0]]
  $region22: #{tpu_custom_call.1} parent=0
    _
  %s5 = ssub.s32 1, %s3
  %s6 = scalar_select 0, %s5, %s3
  $region1: #{tpu_custom_call.1} parent=0
    #allocation2 [shape = 'u8[8192]{0}', space=vmem, size = 0x2000, scoped, tag = 'input window, operand 0, single buffered']
    #allocation3 [shape = 's32[1]{0}', space=sflag, size = 0x4, scoped, tag = 'scoped memory for tpu_custom_call.1']
    #allocation4 [shape = 's32[1]{0}', space=sflag, size = 0x4, scoped, tag = 'scoped memory for tpu_custom_call.1']
    #allocation5 [shape = 'u8[8192]{0}', space=vmem, size = 0x2000, scoped, tag = 'output window, operand 0, single buffered']
    %7 = vsyncpa [#allocation3], 0
    %8 = vsyncpa [#allocation4], 0
    // Predicated region
    $region2: #{tpu_custom_call.1} parent=1 // pred_check
      _
    $region3: #{tpu_custom_call.1} parent=1 // pred_check_branch
      %10 = sbr.rel (0) target = $region5
    $region4: #{tpu_custom_call.1} parent=1 // pred_region
      %s12 = ssub.s32 256, 256
      %13 = vsyncadd [#allocation3], %s12
      %s14 = sshll.u32 [#allocation2], 4
      %s15 = int_to_ptr.vmem [resolvable:$true] %s14
      %20 = dma.hbm_to_vmem [thread:$0]  %s0, 256, %s15, [#allocation3], 128, 128, 8
    $region5: #{tpu_custom_call.1} parent=1 // pred_fallthru
      _
    // Predicated region
    $region6: #{tpu_custom_call.1} parent=1 // pred_check
      _
    $region7: #{tpu_custom_call.1} parent=1 // pred_check_branch
      %22 = sbr.rel (0) target = $region9
    $region8: #{tpu_custom_call.1} parent=1 // pred_region
      _
    $region9: #{tpu_custom_call.1} parent=1 // pred_fallthru
      _
    // Predicated region
    $region10: #{tpu_custom_call.1} parent=1 // pred_check
      _
    $region11: #{tpu_custom_call.1} parent=1 // pred_check_branch
      %24 = sbr.rel (0) target = $region13
    $region12: #{tpu_custom_call.1} parent=1 // pred_region
      %25 = dma.done [#allocation3], 256
    $region13: #{tpu_custom_call.1} parent=1 // pred_fallthru
      _
    %v26 = vld [vmem:[#allocation2] sm:$0xff]
    %v27 = vld [vmem:[#allocation2 + $0x8] sm:$0xff]
    %v30 = vcombine.high %v26, %v26
    %v31 = vcombine.high %v27, %v27
    %vm34 = vcmask 1043456
    %v35 = vsel %vm34, %v26, 0.0
    %v36 = vsel %vm34, %v30, 0.0
    %v37 = vadd.f32 %v35, %v36
    %38 = vadd.xlane.f32.xlu0 %v37
    %v39 = vpop.xlane.xlu0 %38
    %v40 = vsel %vm34, %v27, 0.0
    %v41 = vsel %vm34, %v31, 0.0
    %v42 = vadd.f32 %v40, %v41
    %43 = vadd.xlane.f32.xlu0 %v42
    %v44 = vpop.xlane.xlu0 %43
    %v45 = vsel %vm34, %v39, 0.0
    %v46 = vsel %vm34, %v44, 0.0
    %v47 = vadd.f32 %v45, %v46
    %v48 = vmul.f32 %v47, 0.001953125
    %v51 = vunpack.c.l.s4 839922192
    %v52 = vunpack.c.0.s8 %v51
    %v53 = vlaneseq
    %v54 = vshrl.u32 %v53, 7
    %v55 = vsub.s32 %v52, %v54
    %v56 = vrot.slane %v48, %v55
    %v58 = vsub.f32 %v26, %v56
    %v59 = vsub.f32 %v27, %v56
    %v60 = vmul.f32 %v58, %v58
    %v61 = vmul.f32 %v59, %v59
    %v64 = vcombine.high %v60, %v60
    %v65 = vcombine.high %v61, %v61
    %v68 = vsel %vm34, %v60, 0.0
    %v69 = vsel %vm34, %v64, 0.0
    %v70 = vadd.f32 %v68, %v69
    %71 = vadd.xlane.f32.xlu0 %v70
    %v72 = vpop.xlane.xlu0 %71
    %v73 = vsel %vm34, %v61, 0.0
    %v74 = vsel %vm34, %v65, 0.0
    %v75 = vadd.f32 %v73, %v74
    %76 = vadd.xlane.f32.xlu0 %v75
    %v77 = vpop.xlane.xlu0 %76
    %v78 = vsel %vm34, %v72, 0.0
    %v79 = vsel %vm34, %v77, 0.0
    %v80 = vadd.f32 %v78, %v79
    %v81 = vmul.f32 %v80, 0.001953125
    %v82 = vld [vmem:[%s1] sm:$0xf]
    %v83 = vadd.f32 %v81, 1e-05
    %v84 = vrsqrt.pop %v83
    %v85 = vmul.f32 %v82, %v84
    %v86 = vmul.f32 %v48, %v85
    %88 = vrot.lane.b32.xlu0 %v86, 1
    %v89 = vpop.permute.xlu0 %88
    %v91 = vsub.f32 %v82, %v89
    %93 = vset.pattern.permute.xlu0 0
    %94 = vperm.xlu0 %93, %v85
    %v95 = vpop.permute.xlu0 %94
    %v97 = vunpack.c.l.s4 839922192
    %v98 = vunpack.c.0.s8 %v97
    %v99 = vlaneseq
    %v100 = vshrl.u32 %v99, 7
    %v101 = vsub.s32 %v98, %v100
    %v102 = vrot.slane %v95, %v101
    %v104 = vmul.f32 %v26, %v102
    %v105 = vmul.f32 %v27, %v102
    %107 = vset.pattern.permute.xlu0 1
    %108 = vperm.xlu0 %107, %v91
    %v109 = vpop.permute.xlu0 %108
    %v111 = vunpack.c.l.s4 839922192
    %v112 = vunpack.c.0.s8 %v111
    %v113 = vlaneseq
    %v114 = vshrl.u32 %v113, 7
    %v115 = vsub.s32 %v112, %v114
    %v116 = vrot.slane %v109, %v115
    %v118 = vadd.f32 %v104, %v116
    %v119 = vadd.f32 %v105, %v116
    %v120 = vmax.f32 %v26, %v118
    %v121 = vmax.f32 %v27, %v119
    %122 = vst [vmem:[#allocation5] sm:$0xff] %v120
    %123 = vst [vmem:[#allocation5 + $0x8] sm:$0xff] %v121
    // Predicated region
    $region14: #{tpu_custom_call.1} parent=1 // pred_check
      _
    $region15: #{tpu_custom_call.1} parent=1 // pred_check_branch
      %125 = sbr.rel (0) target = $region17
    $region16: #{tpu_custom_call.1} parent=1 // pred_region
      %s127 = ssub.s32 256, 256
      %128 = vsyncadd [#allocation4], %s127
      %s129 = sshll.u32 [#allocation5], 4
      %s130 = int_to_ptr.vmem [resolvable:$true] %s129
      %135 = dma.vmem_to_hbm [thread:$0]  %s130, 256, %s2, [#allocation4], 128, 128, 8
    $region17: #{tpu_custom_call.1} parent=1 // pred_fallthru
      _
    // Predicated region
    $region18: #{tpu_custom_call.1} parent=1 // pred_check
      _
    $region19: #{tpu_custom_call.1} parent=1 // pred_check_branch
      %137 = sbr.rel (0) target = $region21
    $region20: #{tpu_custom_call.1} parent=1 // pred_region
      %138 = dma.done [#allocation4], 256
    $region21: #{tpu_custom_call.1} parent=1 // pred_fallthru
      _
    %139 = vsyncpa [#allocation3], 1
    %140 = vsyncpa [#allocation4], 1

</llo_original>
